<compile_context>
chip_gen: v7x
topology: tpu7x:2x2x1
jax: 0.10.0
libtpu: 0.0.40
codegen_flags: <defaults>
</compile_context>

<pallas_src>
import jax
import jax.numpy as jnp
from jax.experimental import pallas as pl
from jax.experimental.pallas import tpu as pltpu


def _round_up(x, m):
    return ((x + m - 1) // m) * m


def _critic_kernel(s_ref, w1_ref, b1_ref, w2_ref, b2_ref, w3_ref, b3_ref, o_ref):
    # fc1 + tanh  (MXU matmul, f32 accumulate; tanh on the EUP)
    h = jnp.dot(s_ref[...], w1_ref[...], preferred_element_type=jnp.float32)
    h = jnp.tanh(h + b1_ref[...])                        # b1 is [1, H], broadcasts
    # fc2 + tanh
    h = jnp.dot(h, w2_ref[...], preferred_element_type=jnp.float32)
    h = jnp.tanh(h + b2_ref[...])
    # fc3: single output column -> VPU multiply + lane reduction (skip the MXU)
    v = jnp.sum(h * w3_ref[...], axis=-1, keepdims=True)  # w3 is a [1, H] row
    o_ref[...] = v + b3_ref[0]                            # scalar bias from SMEM


def critic_forward(s, w1, b1, w2, b2, w3_row, b3, *, block_b=512):
    """Fused Critic forward.

    s:       [B, D] float32
    w1:      [D, H]   b1: [1, H]
    w2:      [H, H]   b2: [1, H]
    w3_row:  [1, H]   b3: [1]     (fc3 weight stored as a row, bias as scalar)
    Returns v_s: [B, 1] float32.
    """
    B, D = s.shape
    H = w1.shape[1]

    # Batch tile: multiple of 8 (sublane granularity), capped at block_b.
    # Large tiles amortize the ~0.35 us per-grid-step overhead; tiny batches
    # collapse to a single-step grid.
    TB = min(block_b, _round_up(B, 8))
    Bp = _round_up(B, TB)
    if Bp != B:
        s = jnp.pad(s, ((0, Bp - B), (0, 0)))
    grid = (pl.cdiv(Bp, TB),)

    # Advisory cost hint: this kernel is overhead-bound; let XLA overlap it.
    flops = 2 * Bp * (D * H + H * H + H)
    transcendentals = 2 * Bp * H
    bytes_accessed = 4 * (Bp * D + D * H + H * H + 3 * H + 1 + Bp)
    cost = pl.CostEstimate(
        flops=flops, transcendentals=transcendentals, bytes_accessed=bytes_accessed
    )

    grid_spec = pltpu.PrefetchScalarGridSpec(
        num_scalar_prefetch=0,
        grid=grid,
        in_specs=[
            pl.BlockSpec((TB, D), lambda i: (i, 0)),            # s: streamed per tile
            pl.BlockSpec((D, H), lambda i: (0, 0)),             # w1: VMEM-resident
            pl.BlockSpec((1, H), lambda i: (0, 0)),             # b1
            pl.BlockSpec((H, H), lambda i: (0, 0)),             # w2
            pl.BlockSpec((1, H), lambda i: (0, 0)),             # b2
            pl.BlockSpec((1, H), lambda i: (0, 0)),             # w3 row
            pl.BlockSpec((1,), lambda i: (0,),
                         memory_space=pltpu.MemorySpace.SMEM),  # b3 scalar in SMEM
        ],
        out_specs=pl.BlockSpec((TB, 1), lambda i: (i, 0)),
    )

    out = pl.pallas_call(
        _critic_kernel,
        out_shape=jax.ShapeDtypeStruct((Bp, 1), jnp.float32),
        grid_spec=grid_spec,
        compiler_params=pltpu.CompilerParams(
            dimension_semantics=("parallel",),  # shard batch across v7x's 2 TCs
        ),
        cost_estimate=cost,
    )(s, w1, b1, w2, b2, w3_row, b3)

    return out[:B]


def _orthogonal(key, out_dim, in_dim, gain=0.7):
    """Deterministic orthogonal init matching nn.init.orthogonal_ semantics:
    [out_dim, in_dim] matrix with orthonormal rows/cols, scaled by gain."""
    a = jax.random.normal(key, (out_dim, in_dim), dtype=jnp.float32)
    flat = a if out_dim >= in_dim else a.T
    q, r = jnp.linalg.qr(flat)
    q = q * jnp.sign(jnp.diagonal(r))  # make the decomposition unique
    if out_dim < in_dim:
        q = q.T
    return gain * q[:out_dim, :in_dim]


def make_critic_params(key, projection_embed_dim, hidden_width):
    """Builds parameters in the layout the kernel expects.

    PyTorch Linear weights are [out, in]; the kernel takes [in, out] for
    fc1/fc2, the fc3 weight as a [1, H] row, and the fc3 bias as a scalar.
    """
    k1, k2, k3 = jax.random.split(key, 3)
    w1 = _orthogonal(k1, hidden_width, projection_embed_dim).T   # [D, H]
    w2 = _orthogonal(k2, hidden_width, hidden_width).T           # [H, H]
    w3_row = _orthogonal(k3, 1, hidden_width)                    # [1, H]
    b1 = jnp.zeros((1, hidden_width), jnp.float32)
    b2 = jnp.zeros((1, hidden_width), jnp.float32)
    b3 = jnp.zeros((1,), jnp.float32)
    return w1, b1, w2, b2, w3_row, b3


def _reference(s, w1, b1, w2, b2, w3_row, b3):
    h = jnp.tanh(s @ w1 + b1)
    h = jnp.tanh(h @ w2 + b2)
    return jnp.sum(h * w3_row, axis=-1, keepdims=True) + b3


if __name__ == "__main__":
    # Small shapes consistent with the module's forward:
    #   batch=8, projection_embed_dim=32, hidden_width=32
    B, D, H = 8, 32, 32
    key = jax.random.PRNGKey(0)
    k_s, k_p, k_s2 = jax.random.split(key, 3)

    params = make_critic_params(k_p, D, H)

    # Check 1: single-tile grid (B = 8).
    s = jax.random.normal(k_s, (B, D), dtype=jnp.float32)
    v_s = jax.block_until_ready(critic_forward(s, *params))
    ref = _reference(s, *params)
    assert v_s.shape == (B, 1)
    assert jnp.allclose(v_s, ref, atol=1e-5, rtol=1e-5)

    # Check 2: multi-step grid + batch padding (B = 20, TB forced to 8).
    s2 = jax.random.normal(k_s2, (20, D), dtype=jnp.float32)
    v_s2 = jax.block_until_ready(critic_forward(s2, *params, block_b=8))
    ref2 = _reference(s2, *params)
    assert v_s2.shape == (20, 1)
    assert jnp.allclose(v_s2, ref2, atol=1e-5, rtol=1e-5)

    print("KERNEL_OK")
</pallas_src>

<mosaic_0001>
module attributes {stable_mosaic.version = 11 : i64} {
  func.func @_critic_kernel(%arg0: i32, %arg1: memref<8x32xf32, #tpu.memory_space<vmem>>, %arg2: memref<32x32xf32, #tpu.memory_space<vmem>>, %arg3: memref<1x32xf32, #tpu.memory_space<vmem>>, %arg4: memref<32x32xf32, #tpu.memory_space<vmem>>, %arg5: memref<1x32xf32, #tpu.memory_space<vmem>>, %arg6: memref<1x32xf32, #tpu.memory_space<vmem>>, %arg7: memref<1xf32, #tpu.memory_space<smem>>, %arg8: memref<8x1xf32, #tpu.memory_space<vmem>>) attributes {dimension_semantics = [#tpu.dimension_semantics<parallel>], iteration_bounds = array<i64: 1>, scalar_prefetch = 0 : i64, scratch_operands = 0 : i64, tpu.core_type = #tpu.core_type<tc>, window_params = [{transform_indices = @transform_0, window_bounds = array<i64: 8, 32>}, {pipeline_mode = #tpu.pipeline_mode<synchronous>, transform_indices = @transform_1, window_bounds = array<i64: 32, 32>}, {pipeline_mode = #tpu.pipeline_mode<synchronous>, transform_indices = @transform_2, window_bounds = array<i64: 1, 32>}, {pipeline_mode = #tpu.pipeline_mode<synchronous>, transform_indices = @transform_3, window_bounds = array<i64: 32, 32>}, {pipeline_mode = #tpu.pipeline_mode<synchronous>, transform_indices = @transform_4, window_bounds = array<i64: 1, 32>}, {pipeline_mode = #tpu.pipeline_mode<synchronous>, transform_indices = @transform_5, window_bounds = array<i64: 1, 32>}, {transform_indices = @transform_6, window_bounds = array<i64: 1>}, {transform_indices = @transform_7, window_bounds = array<i64: 8, 1>}]} {
    %c0 = arith.constant 0 : index
    %c0_0 = arith.constant 0 : index
    %0 = vector.load %arg1[%c0, %c0_0] : memref<8x32xf32, #tpu.memory_space<vmem>>, vector<8x32xf32>
    %c0_1 = arith.constant 0 : index
    %c0_2 = arith.constant 0 : index
    %1 = vector.load %arg2[%c0_1, %c0_2] : memref<32x32xf32, #tpu.memory_space<vmem>>, vector<32x32xf32>
    %cst = arith.constant dense<0.000000e+00> : vector<8x32xf32>
    %2 = tpu.matmul %0, %1, %cst {dimension_numbers = #tpu.dot_dimension_numbers<[1], [0], [0], [1], [0, 0, 1, 1], [], []>} : vector<8x32xf32>, vector<32x32xf32>, vector<8x32xf32> -> vector<8x32xf32>
    %c0_3 = arith.constant 0 : index
    %c0_4 = arith.constant 0 : index
    %3 = vector.load %arg3[%c0_3, %c0_4] : memref<1x32xf32, #tpu.memory_space<vmem>>, vector<1x32xf32>
    %4 = vector.broadcast %3 : vector<1x32xf32> to vector<8x32xf32>
    %5 = arith.addf %2, %4 : vector<8x32xf32>
    %6 = math.tanh %5 : vector<8x32xf32>
    %c0_5 = arith.constant 0 : index
    %c0_6 = arith.constant 0 : index
    %7 = vector.load %arg4[%c0_5, %c0_6] : memref<32x32xf32, #tpu.memory_space<vmem>>, vector<32x32xf32>
    %cst_7 = arith.constant dense<0.000000e+00> : vector<8x32xf32>
    %8 = tpu.matmul %6, %7, %cst_7 {dimension_numbers = #tpu.dot_dimension_numbers<[1], [0], [0], [1], [0, 0, 1, 1], [], []>} : vector<8x32xf32>, vector<32x32xf32>, vector<8x32xf32> -> vector<8x32xf32>
    %c0_8 = arith.constant 0 : index
    %c0_9 = arith.constant 0 : index
    %9 = vector.load %arg5[%c0_8, %c0_9] : memref<1x32xf32, #tpu.memory_space<vmem>>, vector<1x32xf32>
    %10 = vector.broadcast %9 : vector<1x32xf32> to vector<8x32xf32>
    %11 = arith.addf %8, %10 : vector<8x32xf32>
    %12 = math.tanh %11 : vector<8x32xf32>
    %c0_10 = arith.constant 0 : index
    %c0_11 = arith.constant 0 : index
    %13 = vector.load %arg6[%c0_10, %c0_11] : memref<1x32xf32, #tpu.memory_space<vmem>>, vector<1x32xf32>
    %14 = vector.broadcast %13 : vector<1x32xf32> to vector<8x32xf32>
    %15 = arith.mulf %12, %14 : vector<8x32xf32>
    %cst_12 = arith.constant dense<0.000000e+00> : vector<8xf32>
    %16 = vector.multi_reduction <add>, %15, %cst_12 [1] : vector<8x32xf32> to vector<8xf32>
    %17 = vector.shape_cast %16 : vector<8xf32> to vector<8x1xf32>
    %c0_13 = arith.constant 0 : index
    %18 = memref.load %arg7[%c0_13] : memref<1xf32, #tpu.memory_space<smem>>
    %19 = vector.broadcast %18 : f32 to vector<8x1xf32>
    %20 = arith.addf %17, %19 : vector<8x1xf32>
    %c0_14 = arith.constant 0 : index
    %c0_15 = arith.constant 0 : index
    %21 = vector.load %arg8[%c0_14, %c0_15] : memref<8x1xf32, #tpu.memory_space<vmem>>, vector<8x1xf32>
    tpu.vector_store %arg8[%c0_14, %c0_15], %20 {strides = array<i32>} : memref<8x1xf32, #tpu.memory_space<vmem>>, vector<8x1xf32>,
    return
  }
  func.func @transform_0(%arg0: i32) -> (i32, i32) {
    %c0_i32 = arith.constant 0 : i32
    %c0_i32_0 = arith.constant 0 : i32
    return %arg0, %c0_i32 : i32, i32
  }
  func.func @transform_1(%arg0: i32) -> (i32, i32) {
    %c0_i32 = arith.constant 0 : i32
    %c0_i32_0 = arith.constant 0 : i32
    %c0_i32_1 = arith.constant 0 : i32
    return %c0_i32, %c0_i32_0 : i32, i32
  }
  func.func @transform_2(%arg0: i32) -> (i32, i32) {
    %c0_i32 = arith.constant 0 : i32
    %c0_i32_0 = arith.constant 0 : i32
    %c0_i32_1 = arith.constant 0 : i32
    return %c0_i32, %c0_i32_0 : i32, i32
  }
  func.func @transform_3(%arg0: i32) -> (i32, i32) {
    %c0_i32 = arith.constant 0 : i32
    %c0_i32_0 = arith.constant 0 : i32
    %c0_i32_1 = arith.constant 0 : i32
    return %c0_i32, %c0_i32_0 : i32, i32
  }
  func.func @transform_4(%arg0: i32) -> (i32, i32) {
    %c0_i32 = arith.constant 0 : i32
    %c0_i32_0 = arith.constant 0 : i32
    %c0_i32_1 = arith.constant 0 : i32
    return %c0_i32, %c0_i32_0 : i32, i32
  }
  func.func @transform_5(%arg0: i32) -> (i32, i32) {
    %c0_i32 = arith.constant 0 : i32
    %c0_i32_0 = arith.constant 0 : i32
    %c0_i32_1 = arith.constant 0 : i32
    return %c0_i32, %c0_i32_0 : i32, i32
  }
  func.func @transform_6(%arg0: i32) -> i32 {
    %c0_i32 = arith.constant 0 : i32
    %c0_i32_0 = arith.constant 0 : i32
    return %c0_i32 : i32
  }
  func.func @transform_7(%arg0: i32) -> (i32, i32) {
    %c0_i32 = arith.constant 0 : i32
    %c0_i32_0 = arith.constant 0 : i32
    return %arg0, %c0_i32 : i32, i32
  }
}

</mosaic_0001>

<llo_original>
// kernel: tpu_custom_call.1
$region0: #{tpu_custom_call.1}
  #allocation0 [shape = 'u32[]', space=smem, size = 0x4, offset = 0x4, fixed_abs, tag = 'smem constant byte address 0x4 - core index']
  #allocation1 [shape = 'u32[144,128]{1,0:T(1,128)}', space=vmem, size = 0x12000, scoped, tag = 'internal scratch']
  #allocation2 [shape = 'f32[1]{0:T(128)S(6)}', space=smem, size = 0x200, scoped, tag = 'scoped memory for tpu_custom_call.1']
  %s0 = inlined_call_operand.hbm [shape: f32[8,32], index: 0, kind: input, shape index: {}]
  %s1 = inlined_call_operand.hbm [shape: f32[32,32], index: 1, kind: input, shape index: {}]
  %s2 = inlined_call_operand.vmem [shape: f32[1,32], index: 2, kind: input, shape index: {}]
  %s3 = inlined_call_operand.hbm [shape: f32[32,32], index: 3, kind: input, shape index: {}]
  %s4 = inlined_call_operand.vmem [shape: f32[1,32], index: 4, kind: input, shape index: {}]
  %s5 = inlined_call_operand.vmem [shape: f32[1,32], index: 5, kind: input, shape index: {}]
  %s6 = inlined_call_operand.<no memory space> [shape: f32[1], index: 6, kind: input, shape index: {}]
  %s7 = inlined_call_operand.vmem [shape: f32[8,1], index: 7, kind: output, shape index: {}]
  %s8 = sld [smem:[#allocation0]]
  $region50: #{tpu_custom_call.1} parent=0
    _
  %s10 = ssub.s32 1, %s8
  %s11 = scalar_select 0, %s10, %s8
  %12 = sst [smem:[#allocation2]] %s6
  $region1: #{tpu_custom_call.1} parent=0
    #allocation3 [shape = 'u8[4096]{0}', space=vmem, size = 0x1000, scoped, tag = 'input window, operand 0, single buffered']
    #allocation4 [shape = 's32[1]{0}', space=sflag, size = 0x4, scoped, tag = 'scoped memory for tpu_custom_call.1']
    #allocation5 [shape = 'u8[16384]{0}', space=vmem, size = 0x4000, scoped, tag = 'input window, operand 1, single buffered']
    #allocation6 [shape = 's32[1]{0}', space=sflag, size = 0x4, scoped, tag = 'scoped memory for tpu_custom_call.1']
    #allocation7 [shape = 'u8[16384]{0}', space=vmem, size = 0x4000, scoped, tag = 'input window, operand 3, single buffered']
    %13 = vsyncpa [#allocation4], 0
    %14 = vsyncpa [#allocation6], 0
    // Predicated region
    $region2: #{tpu_custom_call.1} parent=1 // pred_check
      _
    $region3: #{tpu_custom_call.1} parent=1 // pred_check_branch
      %16 = sbr.rel (0) target = $region5
    $region4: #{tpu_custom_call.1} parent=1 // pred_region
      %s18 = ssub.s32 128, 128
      %19 = vsyncadd [#allocation4], %s18
      %s21 = sshll.u32 [#allocation3], 4
      %s22 = int_to_ptr.vmem [resolvable:$true] %s21
      %24 = dma.hbm_to_vmem [thread:$0]  %s0, 128, %s22, [#allocation4]
    $region5: #{tpu_custom_call.1} parent=1 // pred_fallthru
      _
    // Predicated region
    $region6: #{tpu_custom_call.1} parent=1 // pred_check
      _
    $region7: #{tpu_custom_call.1} parent=1 // pred_check_branch
      %26 = sbr.rel (0) target = $region9
    $region8: #{tpu_custom_call.1} parent=1 // pred_region
      %s28 = ssub.s32 512, 512
      %29 = vsyncadd [#allocation6], %s28
      %s30 = sshll.u32 [#allocation5], 4
      %s31 = int_to_ptr.vmem [resolvable:$true] %s30
      %36 = dma.hbm_to_vmem [thread:$0]  %s1, 512, %s31, [#allocation6], 128, 128, 8
    $region9: #{tpu_custom_call.1} parent=1 // pred_fallthru
      _
    // Predicated region
    $region10: #{tpu_custom_call.1} parent=1 // pred_check
      _
    $region11: #{tpu_custom_call.1} parent=1 // pred_check_branch
      %38 = sbr.rel (0) target = $region13
    $region12: #{tpu_custom_call.1} parent=1 // pred_region
      _
    $region13: #{tpu_custom_call.1} parent=1 // pred_fallthru
      _
    // Predicated region
    $region14: #{tpu_custom_call.1} parent=1 // pred_check
      _
    $region15: #{tpu_custom_call.1} parent=1 // pred_check_branch
      %40 = sbr.rel (0) target = $region17
    $region16: #{tpu_custom_call.1} parent=1 // pred_region
      %s42 = ssub.s32 512, 512
      %43 = vsyncadd [#allocation6], %s42
      %s44 = sshll.u32 [#allocation7], 4
      %s45 = int_to_ptr.vmem [resolvable:$true] %s44
      %50 = dma.hbm_to_vmem [thread:$0]  %s3, 512, %s45, [#allocation6], 128, 128, 8
    $region17: #{tpu_custom_call.1} parent=1 // pred_fallthru
      _
    // Predicated region
    $region18: #{tpu_custom_call.1} parent=1 // pred_check
      _
    $region19: #{tpu_custom_call.1} parent=1 // pred_check_branch
      %52 = sbr.rel (0) target = $region21
    $region20: #{tpu_custom_call.1} parent=1 // pred_region
      _
    $region21: #{tpu_custom_call.1} parent=1 // pred_fallthru
      _
    // Predicated region
    $region22: #{tpu_custom_call.1} parent=1 // pred_check
      _
    $region23: #{tpu_custom_call.1} parent=1 // pred_check_branch
      %54 = sbr.rel (0) target = $region25
    $region24: #{tpu_custom_call.1} parent=1 // pred_region
      _
    $region25: #{tpu_custom_call.1} parent=1 // pred_fallthru
      _
    // Predicated region
    $region26: #{tpu_custom_call.1} parent=1 // pred_check
      _
    $region27: #{tpu_custom_call.1} parent=1 // pred_check_branch
      %56 = sbr.rel (0) target = $region29
    $region28: #{tpu_custom_call.1} parent=1 // pred_region
      _
    $region29: #{tpu_custom_call.1} parent=1 // pred_fallthru
      _
    // Predicated region
    $region30: #{tpu_custom_call.1} parent=1 // pred_check
      _
    $region31: #{tpu_custom_call.1} parent=1 // pred_check_branch
      %58 = sbr.rel (0) target = $region33
    $region32: #{tpu_custom_call.1} parent=1 // pred_region
      %59 = dma.done [#allocation4], 128
    $region33: #{tpu_custom_call.1} parent=1 // pred_fallthru
      _
    // Predicated region
    $region34: #{tpu_custom_call.1} parent=1 // pred_check
      _
    $region35: #{tpu_custom_call.1} parent=1 // pred_check_branch
      %61 = sbr.rel (0) target = $region37
    $region36: #{tpu_custom_call.1} parent=1 // pred_region
      %62 = dma.done [#allocation6], 512
    $region37: #{tpu_custom_call.1} parent=1 // pred_fallthru
      _
    // Predicated region
    $region38: #{tpu_custom_call.1} parent=1 // pred_check
      _
    $region39: #{tpu_custom_call.1} parent=1 // pred_check_branch
      %64 = sbr.rel (0) target = $region41
    $region40: #{tpu_custom_call.1} parent=1 // pred_region
      %65 = dma.done [#allocation6], 512
    $region41: #{tpu_custom_call.1} parent=1 // pred_fallthru
      _
    %v66 = vld [vmem:[#allocation3] sm:$0xff]
    %v67 = vld [vmem:[#allocation5] sm:$0xff]
    %v68 = vld [vmem:[#allocation5 + $0x8] sm:$0xff]
    %v69 = vld [vmem:[#allocation5 + $0x10] sm:$0xff]
    %v70 = vld [vmem:[#allocation5 + $0x18] sm:$0xff]
    %v71 = vld [vmem:[%s2] sm:$0x1]
    %v73 = vlaneseq
    %v74 = vshrl.u32 %v73, 7
    %v75 = vsub.s32 0, %v74
    %v76 = vrot.slane %v71, %v75
    %vm78 = vcmask 261120
    %v80 = vsel %vm78, %v66, 0
    %82 = vmatprep.subr.mxu0 0.0
    %83 = vmatpush1.msra.mxu0 %v67
    %84 = vmatprep.subr.mxu0 0.0
    %85 = vmatpush1.msra.mxu0 %v68
    %86 = vmatprep.subr.mxu0 0.0
    %87 = vmatpush1.msra.mxu0 %v69
    %88 = vmatprep.subr.mxu0 0.0
    %89 = vmatpush1.msra.mxu0 %v70
    %90 = vmatprep.subr.mxu0 0.0
    %91 = vmatpush1.msra.mxu0 0.0
    %92 = vmatprep.subr.mxu0 0.0
    %93 = vmatpush1.msra.mxu0 0.0
    %94 = vmatprep.subr.mxu0 0.0
    %95 = vmatpush1.msra.mxu0 0.0
    %96 = vmatprep.subr.mxu0 0.0
    %97 = vmatpush1.msra.mxu0 0.0
    %98 = vmatprep.subr.mxu0 0.0
    %99 = vmatpush1.msra.mxu0 0.0
    %100 = vmatprep.subr.mxu0 0.0
    %101 = vmatpush1.msra.mxu0 0.0
    %102 = vmatprep.subr.mxu0 0.0
    %103 = vmatpush1.msra.mxu0 0.0
    %104 = vmatprep.subr.mxu0 0.0
    %105 = vmatpush1.msra.mxu0 0.0
    %106 = vmatprep.subr.mxu0 0.0
    %107 = vmatpush1.msra.mxu0 0.0
    %108 = vmatprep.subr.mxu0 0.0
    %109 = vmatpush1.msra.mxu0 0.0
    %110 = vmatprep.subr.mxu0 0.0
    %111 = vmatpush1.msra.mxu0 0.0
    %112 = vmatprep.subr.mxu0 0.0
    %113 = vmatpush1.msra.mxu0 0.0
    %114 = vmatprep.subr.mxu0 0.0
    %115 = vmatpush1.msra.mxu0 0.0
    %116 = vmatprep.subr.mxu0 0.0
    %117 = vmatpush1.msra.mxu0 0.0
    %118 = vmatprep.subr.mxu0 0.0
    %119 = vmatpush1.msra.mxu0 0.0
    %120 = vmatprep.subr.mxu0 0.0
    %121 = vmatpush1.msra.mxu0 0.0
    %122 = vmatprep.subr.mxu0 0.0
    %123 = vmatpush1.msra.mxu0 0.0
    %124 = vmatprep.subr.mxu0 0.0
    %125 = vmatpush1.msra.mxu0 0.0
    %126 = vmatprep.subr.mxu0 0.0
    %127 = vmatpush1.msra.mxu0 0.0
    %128 = vmatprep.subr.mxu0 0.0
    %129 = vmatpush1.msra.mxu0 0.0
    %130 = vmatprep.subr.mxu0 0.0
    %131 = vmatpush1.msra.mxu0 0.0
    %132 = vmatprep.subr.mxu0 0.0
    %133 = vmatpush1.msra.mxu0 0.0
    %134 = vmatprep.subr.mxu0 0.0
    %135 = vmatpush1.msra.mxu0 0.0
    %136 = vmatprep.subr.mxu0 0.0
    %137 = vmatpush1.msra.mxu0 0.0
    %138 = vmatprep.subr.mxu0 0.0
    %139 = vmatpush1.msra.mxu0 0.0
    %140 = vmatprep.subr.mxu0 0.0
    %141 = vmatpush1.msra.mxu0 0.0
    %142 = vmatprep.subr.mxu0 0.0
    %143 = vmatpush1.msra.mxu0 0.0
    %144 = vmatprep.subr.mxu0 0.0
    %145 = vmatpush1.msra.mxu0 0.0
    %146 = vmatprep.mubr.f32.mxu0 0.0
    %147 = vmatmul.mubr.f32.gmra.mrb[0].mxu0 %v80
    %v148 = vpop.f32.mrb[0].mxu0
    %v149 = vadd.f32 %v76, %v148
    %v150 = vpop.f32.mrb[0].mxu0
    %151 = vdwg.mxu0
    %v152 = vtanh.pop %v149
    %v153 = vld [vmem:[#allocation7] sm:$0xff]
    %v154 = vld [vmem:[#allocation7 + $0x8] sm:$0xff]
    %v155 = vld [vmem:[#allocation7 + $0x10] sm:$0xff]
    %v156 = vld [vmem:[#allocation7 + $0x18] sm:$0xff]
    %v157 = vld [vmem:[%s4] sm:$0x1]
    %v159 = vlaneseq
    %v160 = vshrl.u32 %v159, 7
    %v161 = vsub.s32 0, %v160
    %v162 = vrot.slane %v157, %v161
    %v165 = vsel %vm78, %v152, 0
    %167 = vmatprep.subr.mxu0 0.0
    %168 = vmatpush1.msra.mxu0 %v153
    %169 = vmatprep.subr.mxu0 0.0
    %170 = vmatpush1.msra.mxu0 %v154
    %171 = vmatprep.subr.mxu0 0.0
    %172 = vmatpush1.msra.mxu0 %v155
    %173 = vmatprep.subr.mxu0 0.0
    %174 = vmatpush1.msra.mxu0 %v156
    %175 = vmatprep.subr.mxu0 0.0
    %176 = vmatpush1.msra.mxu0 0.0
    %177 = vmatprep.subr.mxu0 0.0
    %178 = vmatpush1.msra.mxu0 0.0
    %179 = vmatprep.subr.mxu0 0.0
    %180 = vmatpush1.msra.mxu0 0.0
    %181 = vmatprep.subr.mxu0 0.0
    %182 = vmatpush1.msra.mxu0 0.0
    %183 = vmatprep.subr.mxu0 0.0
    %184 = vmatpush1.msra.mxu0 0.0
    %185 = vmatprep.subr.mxu0 0.0
    %186 = vmatpush1.msra.mxu0 0.0
    %187 = vmatprep.subr.mxu0 0.0
    %188 = vmatpush1.msra.mxu0 0.0
    %189 = vmatprep.subr.mxu0 0.0
    %190 = vmatpush1.msra.mxu0 0.0
    %191 = vmatprep.subr.mxu0 0.0
    %192 = vmatpush1.msra.mxu0 0.0
    %193 = vmatprep.subr.mxu0 0.0
    %194 = vmatpush1.msra.mxu0 0.0
    %195 = vmatprep.subr.mxu0 0.0
    %196 = vmatpush1.msra.mxu0 0.0
    %197 = vmatprep.subr.mxu0 0.0
    %198 = vmatpush1.msra.mxu0 0.0
    %199 = vmatprep.subr.mxu0 0.0
    %200 = vmatpush1.msra.mxu0 0.0
    %201 = vmatprep.subr.mxu0 0.0
    %202 = vmatpush1.msra.mxu0 0.0
    %203 = vmatprep.subr.mxu0 0.0
    %204 = vmatpush1.msra.mxu0 0.0
    %205 = vmatprep.subr.mxu0 0.0
    %206 = vmatpush1.msra.mxu0 0.0
    %207 = vmatprep.subr.mxu0 0.0
    %208 = vmatpush1.msra.mxu0 0.0
    %209 = vmatprep.subr.mxu0 0.0
    %210 = vmatpush1.msra.mxu0 0.0
    %211 = vmatprep.subr.mxu0 0.0
    %212 = vmatpush1.msra.mxu0 0.0
    %213 = vmatprep.subr.mxu0 0.0
    %214 = vmatpush1.msra.mxu0 0.0
    %215 = vmatprep.subr.mxu0 0.0
    %216 = vmatpush1.msra.mxu0 0.0
    %217 = vmatprep.subr.mxu0 0.0
    %218 = vmatpush1.msra.mxu0 0.0
    %219 = vmatprep.subr.mxu0 0.0
    %220 = vmatpush1.msra.mxu0 0.0
    %221 = vmatprep.subr.mxu0 0.0
    %222 = vmatpush1.msra.mxu0 0.0
    %223 = vmatprep.subr.mxu0 0.0
    %224 = vmatpush1.msra.mxu0 0.0
    %225 = vmatprep.subr.mxu0 0.0
    %226 = vmatpush1.msra.mxu0 0.0
    %227 = vmatprep.subr.mxu0 0.0
    %228 = vmatpush1.msra.mxu0 0.0
    %229 = vmatprep.subr.mxu0 0.0
    %230 = vmatpush1.msra.mxu0 0.0
    %231 = vmatprep.mubr.f32.mxu0 0.0
    %232 = vmatmul.mubr.f32.gmra.mrb[0].mxu0 %v165
    %v233 = vpop.f32.mrb[0].mxu0
    %v234 = vadd.f32 %v162, %v233
    %v235 = vpop.f32.mrb[0].mxu0
    %236 = vdwg.mxu0
    %v237 = vtanh.pop %v234
    %v238 = vld [vmem:[%s5] sm:$0x1]
    %v240 = vlaneseq
    %v241 = vshrl.u32 %v240, 7
    %v242 = vsub.s32 0, %v241
    %v243 = vrot.slane %v238, %v242
    %v245 = vmul.f32 %v237, %v243
    %v246 = vsel %vm78, %v245, 0.0
    %247 = vadd.xlane.f32.xlu0 %v246
    %v248 = vpop.xlane.xlu0 %247
    %s249 = sld [smem:[#allocation2]]
    %v250 = vstv %s249
    %v251 = vadd.f32 %v248, %v250
    %vm252 = vcmask 7168
    %253 = vst.msk [vmem:[%s7] sm:$0xff] %vm252, %v251
    // Predicated region
    $region42: #{tpu_custom_call.1} parent=1 // pred_check
      _
    $region43: #{tpu_custom_call.1} parent=1 // pred_check_branch
      %255 = sbr.rel (0) target = $region45
    $region44: #{tpu_custom_call.1} parent=1 // pred_region
      _
    $region45: #{tpu_custom_call.1} parent=1 // pred_fallthru
      _
    // Predicated region
    $region46: #{tpu_custom_call.1} parent=1 // pred_check
      _
    $region47: #{tpu_custom_call.1} parent=1 // pred_check_branch
      %257 = sbr.rel (0) target = $region49
    $region48: #{tpu_custom_call.1} parent=1 // pred_region
      _
    $region49: #{tpu_custom_call.1} parent=1 // pred_fallthru
      _
    %258 = vsyncpa [#allocation4], 1
    %259 = vsyncpa [#allocation6], 1

</llo_original>
